<compile_context>
chip_gen: v7x
topology: tpu7x:2x2x1
jax: 0.10.0
libtpu: 0.0.40
codegen_flags: <defaults>
</compile_context>

<pallas_src>
import functools

import jax
import jax.numpy as jnp
from jax.experimental import pallas as pl
from jax.experimental.pallas import tpu as pltpu


_MIB = 1024 * 1024
_MAX_TILE_BYTES = 8 * _MIB   # per-input per-step tile cap (bounds unrolling / intermediates)


@functools.lru_cache(maxsize=1)
def _vmem_budget_and_limit():
    """Generation-aware (budget, limit): budget sizes the double-buffered input set."""
    try:
        phys = int(pltpu.get_tpu_info().vmem_capacity_bytes)
    except Exception:            # conservative default if the query is unavailable
        phys = 64 * _MIB
    if phys >= 100 * _MIB:       # v5e / v6e: 128 MiB physical VMEM
        return 48 * _MIB, 96 * _MIB
    return 24 * _MIB, 48 * _MIB  # v7x: 64 MiB physical VMEM -- stay clear of OOM


def _sublane(dtype):
    # 8 rows/vreg for 32-bit dtypes, 16 for 16-bit, 32 for 8-bit.
    return max(8, 32 // jnp.dtype(dtype).itemsize)


def _pick_3d_tiles(B, R, itemsize, sub, budget, block_rows, block_batch):
    if block_batch is not None:
        tb = min(block_batch, B)
    else:
        tb = B if B <= 8 else 8            # (tb, 1) output block needs tb == B or tb % 8 == 0
    if block_rows is not None:
        tr = min(block_rows, R)
    elif R <= sub:
        tr = R                             # full extent -> always a legal block
    else:
        per_row = tb * 128 * itemsize * 4  # 2 inputs x 2 pipeline buffers (no acc term)
        tr = budget // per_row
        tr = min(tr, _MAX_TILE_BYTES // (tb * 128 * itemsize))
        tr = max(sub, (tr // sub) * sub)
        if tr >= R:
            tr = R
    return tb, tr


def _pick_2d_cols(B, N, itemsize, budget, block_cols):
    if block_cols is not None:
        return min(block_cols, N)
    per_col = B * itemsize * 4             # 2 inputs x 2 pipeline buffers
    tn = budget // per_col
    tn = min(tn, _MAX_TILE_BYTES // (B * itemsize))
    tn = max(128, (tn // 128) * 128)
    if tn >= N:
        return N                           # single full-extent block
    return tn


def _mse_kernel_3d(g_ref, p_ref, o_ref, acc_ref, *,
                   tile, limit, grid_r, blocks_per_core, needs_mask):
    """(tb, tr, 128) tiles -> per-step partial sums in a (tb, 128) f32 scratch."""
    j = pl.program_id(2)

    @pl.when(j == 0)
    def _init():
        acc_ref[...] = jnp.zeros_like(acc_ref)

    def _accum(mask_tail, gb):
        g = g_ref[...].astype(jnp.float32)
        p = p_ref[...].astype(jnp.float32)
        err = g - p
        sq = err * err
        if mask_tail:
            row = jax.lax.broadcasted_iota(jnp.int32, sq.shape, 1)
            sq = jnp.where(row + gb * tile < limit, sq, jnp.float32(0.0))
        # Tile-local reduce: ~1 VALU add per data vreg, no accumulator RMW per vreg.
        acc_ref[...] += jnp.sum(sq, axis=1)

    if needs_mask:
        gb = pl.program_id(0) * blocks_per_core + j   # global reduction-block index

        @pl.when(gb >= grid_r - 1)                    # last real block / phantom blocks
        def _tail_block():
            _accum(True, gb)

        @pl.when(gb < grid_r - 1)                     # bulk blocks: no mask work
        def _bulk_block():
            _accum(False, gb)
    else:
        _accum(False, j)

    @pl.when(j == pl.num_programs(2) - 1)
    def _finalize():
        # Single cross-lane reduce + single (tb, 1) store per (core, batch-block) sweep.
        o_ref[...] = jnp.sum(acc_ref[...], axis=1, keepdims=True)


def _mse_kernel_2d(g_ref, p_ref, o_ref, *,
                   tile, limit, grid_n, blocks_per_core, needs_mask):
    """Ragged-N fallback: (B, tn) tiles, accumulate directly into resident (B, 1) output."""
    j = pl.program_id(1)

    @pl.when(j == 0)
    def _init():
        o_ref[...] = jnp.zeros_like(o_ref)

    def _accum(mask_tail, gb):
        g = g_ref[...].astype(jnp.float32)
        p = p_ref[...].astype(jnp.float32)
        err = g - p
        sq = err * err
        if mask_tail:
            col = jax.lax.broadcasted_iota(jnp.int32, sq.shape, 1)
            sq = jnp.where(col + gb * tile < limit, sq, jnp.float32(0.0))
        o_ref[...] += jnp.sum(sq, axis=1, keepdims=True)

    if needs_mask:
        gb = pl.program_id(0) * blocks_per_core + j

        @pl.when(gb >= grid_n - 1)
        def _tail_block():
            _accum(True, gb)

        @pl.when(gb < grid_n - 1)
        def _bulk_block():
            _accum(False, gb)
    else:
        _accum(False, j)


@functools.partial(jax.jit, static_argnames=("block_rows", "block_cols", "block_batch"))
def mse_loss(gen_traj, pred_traj, *, block_rows=None, block_cols=None, block_batch=None):
    """Pallas equivalent of MSEloss.forward. Returns a float32 vector of shape (B,)."""
    assert gen_traj.shape == pred_traj.shape
    assert gen_traj.ndim >= 2
    B = gen_traj.shape[0]
    N = 1
    for d in gen_traj.shape[1:]:
        N *= d
    itemsize = jnp.dtype(gen_traj.dtype).itemsize
    sub = _sublane(gen_traj.dtype)
    budget, vmem_limit = _vmem_budget_and_limit()
    cost = pl.CostEstimate(flops=3 * B * N, transcendentals=0,
                           bytes_accessed=2 * B * N * itemsize + 8 * B)

    if N % 128 == 0 and N >= 128:
        # Fast path: lane-major (B, R, 128) view -> fully packed (sub, 128) tiles.
        R = N // 128
        g = gen_traj.reshape(B, R, 128)
        p = pred_traj.reshape(B, R, 128)
        tb, tr = _pick_3d_tiles(B, R, itemsize, sub, budget, block_rows, block_batch)
        nb = pl.cdiv(B, tb)
        grid_r = pl.cdiv(R, tr)
        # 2-way split of the reduction range when batch parallelism is absent (v7x 2 TCs).
        ncr = 2 if (nb == 1 and grid_r >= 2) else 1
        nrpc = pl.cdiv(grid_r, ncr)
        needs_mask = (R % tr != 0) or (ncr * nrpc != grid_r)

        def in_map(c, b, r):
            return (b, jnp.minimum(c * nrpc + r, grid_r - 1), 0)

        kernel = functools.partial(
            _mse_kernel_3d, tile=tr, limit=R, grid_r=grid_r,
            blocks_per_core=nrpc, needs_mask=needs_mask)
        out = pl.pallas_call(
            kernel,
            out_shape=jax.ShapeDtypeStruct((ncr, B, 1), jnp.float32),
            grid_spec=pltpu.PrefetchScalarGridSpec(
                num_scalar_prefetch=0,
                grid=(ncr, nb, nrpc),
                in_specs=[
                    pl.BlockSpec((tb, tr, 128), in_map),
                    pl.BlockSpec((tb, tr, 128), in_map),
                ],
                out_specs=pl.BlockSpec((None, tb, 1), lambda c, b, r: (c, b, 0)),
                scratch_shapes=[pltpu.VMEM((tb, 128), jnp.float32)],
            ),
            compiler_params=pltpu.CompilerParams(
                dimension_semantics=("parallel", "parallel", "arbitrary"),
                vmem_limit_bytes=vmem_limit,
            ),
            cost_estimate=cost,
        )(g, p)
    else:
        # Fallback: ragged N. 2-D (B, tn) blocks, bytes-sized tiles, lane-tail masked
        # only on the last block (no HBM-side padding pass).
        g = gen_traj.reshape(B, N)
        p = pred_traj.reshape(B, N)
        tn = _pick_2d_cols(B, N, itemsize, budget, block_cols)
        grid_n = pl.cdiv(N, tn)
        ncr = 2 if grid_n >= 2 else 1
        njpc = pl.cdiv(grid_n, ncr)
        needs_mask = (N % tn != 0) or (ncr * njpc != grid_n)

        def in_map(c, j):
            return (0, jnp.minimum(c * njpc + j, grid_n - 1))

        kernel = functools.partial(
            _mse_kernel_2d, tile=tn, limit=N, grid_n=grid_n,
            blocks_per_core=njpc, needs_mask=needs_mask)
        out = pl.pallas_call(
            kernel,
            out_shape=jax.ShapeDtypeStruct((ncr, B, 1), jnp.float32),
            grid_spec=pltpu.PrefetchScalarGridSpec(
                num_scalar_prefetch=0,
                grid=(ncr, njpc),
                in_specs=[
                    pl.BlockSpec((B, tn), in_map),
                    pl.BlockSpec((B, tn), in_map),
                ],
                out_specs=pl.BlockSpec((None, B, 1), lambda c, j: (c, 0, 0)),
            ),
            compiler_params=pltpu.CompilerParams(
                dimension_semantics=("parallel", "arbitrary"),
                vmem_limit_bytes=vmem_limit,
            ),
            cost_estimate=cost,
        )(g, p)

    if ncr > 1:
        return jnp.sum(out[:, :, 0], axis=0)
    return out[0, :, 0]


def mse_loss_ref(gen_traj, pred_traj):
    err = gen_traj.astype(jnp.float32) - pred_traj.astype(jnp.float32)
    return (err ** 2).sum(axis=-1).sum(axis=2).sum(axis=1)


if __name__ == "__main__":
    key = jax.random.PRNGKey(0)

    cases = [
        # (shape (B, A, T, D), dtype, kernel kwargs)
        ((2, 4, 48, 2), jnp.float32, {}),                     # module-sized; fast path, R=3 single block
        ((2, 8, 64, 4), jnp.float32, {}),                     # fast path, single reduction step
        ((2, 10, 32, 8), jnp.float32, dict(block_rows=8)),    # multi-step + 2-way core split + tail mask + phantom block
        ((3, 5, 33, 3), jnp.float32, dict(block_cols=128)),   # ragged N fallback, lane-tail mask + core split
        ((20, 8, 16, 8), jnp.float32, dict(block_batch=8)),   # parallel batch axis + partial edge batch block
        ((2, 8, 64, 4), jnp.bfloat16, {}),                    # bf16 inputs, f32 accumulation / f32 output
        ((2, 10, 32, 8), jnp.bfloat16, dict(block_rows=16)),  # bf16 multi-step, masked tail block on core 1
    ]
    for idx, (shape, dtype, kwargs) in enumerate(cases):
        k1, k2 = jax.random.split(jax.random.fold_in(key, idx))
        gen_traj = jax.random.normal(k1, shape, dtype=jnp.float32).astype(dtype)
        pred_traj = jax.random.normal(k2, shape, dtype=jnp.float32).astype(dtype)

        out = jax.block_until_ready(mse_loss(gen_traj, pred_traj, **kwargs))
        ref = mse_loss_ref(gen_traj, pred_traj)

        assert out.shape == (shape[0],), (shape, out.shape)
        assert out.dtype == jnp.float32, out.dtype
        assert jnp.allclose(out, ref, rtol=1e-4, atol=1e-4), (shape, dtype, out, ref)

    print("KERNEL_OK")
</pallas_src>

<mosaic_0001>
module attributes {stable_mosaic.version = 11 : i64} {
  func.func @_mse_kernel_3d(%arg0: i32, %arg1: i32, %arg2: i32, %arg3: memref<2x3x128xf32, #tpu.memory_space<vmem>>, %arg4: memref<2x3x128xf32, #tpu.memory_space<vmem>>, %arg5: memref<1x2x1xf32, #tpu.memory_space<vmem>>, %arg6: memref<2x128xf32, #tpu.memory_space<vmem>>) attributes {dimension_semantics = [#tpu.dimension_semantics<parallel>, #tpu.dimension_semantics<parallel>, #tpu.dimension_semantics<arbitrary>], iteration_bounds = array<i64: 1, 1, 1>, scalar_prefetch = 0 : i64, scratch_operands = 1 : i64, tpu.core_type = #tpu.core_type<tc>, window_params = [{transform_indices = @transform_0, window_bounds = array<i64: 2, 3, 128>}, {transform_indices = @transform_1, window_bounds = array<i64: 2, 3, 128>}, {transform_indices = @transform_2, window_bounds = array<i64: 1, 2, 1>}]} {
    %c0_i32 = arith.constant 0 : i32
    %0 = arith.cmpi eq, %arg2, %c0_i32 : i32
    %1 = arith.extui %0 : i1 to i32
    %c0_i32_0 = arith.constant 0 : i32
    %2 = arith.cmpi ne, %1, %c0_i32_0 : i32
    scf.if %2 {
      %cst_12 = arith.constant 0.000000e+00 : f32
      %14 = vector.broadcast %cst_12 : f32 to vector<2x128xf32>
      %c0_13 = arith.constant 0 : index
      %c0_14 = arith.constant 0 : index
      %15 = vector.load %arg6[%c0_13, %c0_14] : memref<2x128xf32, #tpu.memory_space<vmem>>, vector<2x128xf32>
      tpu.vector_store %arg6[%c0_13, %c0_14], %14 {strides = array<i32>} : memref<2x128xf32, #tpu.memory_space<vmem>>, vector<2x128xf32>,
    } else {
    }
    %c0 = arith.constant 0 : index
    %c0_1 = arith.constant 0 : index
    %c0_2 = arith.constant 0 : index
    %3 = vector.load %arg3[%c0, %c0_1, %c0_2] : memref<2x3x128xf32, #tpu.memory_space<vmem>>, vector<2x3x128xf32>
    %c0_3 = arith.constant 0 : index
    %c0_4 = arith.constant 0 : index
    %c0_5 = arith.constant 0 : index
    %4 = vector.load %arg4[%c0_3, %c0_4, %c0_5] : memref<2x3x128xf32, #tpu.memory_space<vmem>>, vector<2x3x128xf32>
    %5 = arith.subf %3, %4 : vector<2x3x128xf32>
    %6 = arith.mulf %5, %5 : vector<2x3x128xf32>
    %c0_6 = arith.constant 0 : index
    %c0_7 = arith.constant 0 : index
    %7 = vector.load %arg6[%c0_6, %c0_7] : memref<2x128xf32, #tpu.memory_space<vmem>>, vector<2x128xf32>
    %cst = arith.constant dense<0.000000e+00> : vector<2x128xf32>
    %8 = vector.multi_reduction <add>, %6, %cst [1] : vector<2x3x128xf32> to vector<2x128xf32>
    %9 = arith.addf %7, %8 : vector<2x128xf32>
    %c0_8 = arith.constant 0 : index
    %c0_9 = arith.constant 0 : index
    %10 = vector.load %arg6[%c0_8, %c0_9] : memref<2x128xf32, #tpu.memory_space<vmem>>, vector<2x128xf32>
    tpu.vector_store %arg6[%c0_8, %c0_9], %9 {strides = array<i32>} : memref<2x128xf32, #tpu.memory_space<vmem>>, vector<2x128xf32>,
    %c0_i32_10 = arith.constant 0 : i32
    %11 = arith.cmpi eq, %arg2, %c0_i32_10 : i32
    %12 = arith.extui %11 : i1 to i32
    %c0_i32_11 = arith.constant 0 : i32
    %13 = arith.cmpi ne, %12, %c0_i32_11 : i32
    scf.if %13 {
      %c0_12 = arith.constant 0 : index
      %c0_13 = arith.constant 0 : index
      %14 = vector.load %arg6[%c0_12, %c0_13] : memref<2x128xf32, #tpu.memory_space<vmem>>, vector<2x128xf32>
      %cst_14 = arith.constant dense<0.000000e+00> : vector<2xf32>
      %15 = vector.multi_reduction <add>, %14, %cst_14 [1] : vector<2x128xf32> to vector<2xf32>
      %16 = vector.shape_cast %15 : vector<2xf32> to vector<2x1xf32>
      %c0_15 = arith.constant 0 : index
      %c0_16 = arith.constant 0 : index
      %c0_17 = arith.constant 0 : index
      %17 = vector.load %arg5[%c0_15, %c0_16, %c0_17] : memref<1x2x1xf32, #tpu.memory_space<vmem>>, vector<1x2x1xf32>
      %18 = vector.shape_cast %17 : vector<1x2x1xf32> to vector<2x1xf32>
      %19 = vector.shape_cast %16 : vector<2x1xf32> to vector<1x2x1xf32>
      tpu.vector_store %arg5[%c0_15, %c0_16, %c0_17], %19 {strides = array<i32>} : memref<1x2x1xf32, #tpu.memory_space<vmem>>, vector<1x2x1xf32>,
    } else {
    }
    return
  }
  func.func @transform_0(%arg0: i32, %arg1: i32, %arg2: i32) -> (i32, i32, i32) {
    %c1_i32 = arith.constant 1 : i32
    %0 = arith.muli %arg0, %c1_i32 : i32
    %1 = arith.addi %0, %arg2 : i32
    %c0_i32 = arith.constant 0 : i32
    %2 = arith.minsi %1, %c0_i32 : i32
    %c0_i32_0 = arith.constant 0 : i32
    %c0_i32_1 = arith.constant 0 : i32
    return %arg1, %2, %c0_i32_0 : i32, i32, i32
  }
  func.func @transform_1(%arg0: i32, %arg1: i32, %arg2: i32) -> (i32, i32, i32) {
    %c1_i32 = arith.constant 1 : i32
    %0 = arith.muli %arg0, %c1_i32 : i32
    %1 = arith.addi %0, %arg2 : i32
    %c0_i32 = arith.constant 0 : i32
    %2 = arith.minsi %1, %c0_i32 : i32
    %c0_i32_0 = arith.constant 0 : i32
    %c0_i32_1 = arith.constant 0 : i32
    return %arg1, %2, %c0_i32_0 : i32, i32, i32
  }
  func.func @transform_2(%arg0: i32, %arg1: i32, %arg2: i32) -> (i32, i32, i32) {
    %c0_i32 = arith.constant 0 : i32
    %c0_i32_0 = arith.constant 0 : i32
    return %arg0, %arg1, %c0_i32 : i32, i32, i32
  }
}

</mosaic_0001>

<llo_original>
// kernel: mse_loss.1
$region0: #{mse_loss.1}
  #allocation0 [shape = 'u32[]', space=smem, size = 0x4, offset = 0x4, fixed_abs, tag = 'smem constant byte address 0x4 - core index']
  #allocation1 [shape = 'u32[144,128]{1,0:T(1,128)}', space=vmem, size = 0x12000, scoped, tag = 'internal scratch']
  #allocation2 [shape = 'f32[2,128]{1,0:T(2,128)}', space=vmem, size = 0x400, scoped, tag = 'scratch operand']
  %s0 = inlined_call_operand.vmem [shape: f32[2,3,128], index: 0, kind: input, shape index: {}]
  %s1 = inlined_call_operand.vmem [shape: f32[2,3,128], index: 1, kind: input, shape index: {}]
  %s2 = inlined_call_operand.vmem [shape: f32[1,2,1], index: 2, kind: output, shape index: {}]
  %s3 = sld [smem:[#allocation0]]
  $region26: #{mse_loss.1} parent=0
    _
  %s5 = ssub.s32 1, %s3
  %s6 = scalar_select 0, %s5, %s3
  // Predicated region
  $region2: #{mse_loss.1} parent=0 // pred_check
    _
  $region3: #{mse_loss.1} parent=0 // pred_check_branch
    %8 = sbr.rel (0) target = $region5
  $region4: #{mse_loss.1} parent=0 // pred_region
    %s9 = sadd.s32 0, 0
    %p10 = scmp.lt.s32.totalorder %s9, 0
    %s11 = scalar_select %p10, %s9, 0
    %p12 = scmp.lt.s32.totalorder %s11, 0
    %s13 = scalar_select %p12, %s11, 0
    %s14 = smul.addr %s13, 4
    %s15 = scalar_lea.vmem %s0, %s14
    %s16 = sadd.s32 0, 0
    %p17 = scmp.lt.s32.totalorder %s16, 0
    %s18 = scalar_select %p17, %s16, 0
  $region5: #{mse_loss.1} parent=0 // pred_fallthru
    _
  // Predicated region
  $region6: #{mse_loss.1} parent=0 // pred_check
    _
  $region7: #{mse_loss.1} parent=0 // pred_check_branch
    %20 = sbr.rel (0) target = $region9
  $region8: #{mse_loss.1} parent=0 // pred_region
    %s21 = sadd.s32 0, 0
    %p22 = scmp.lt.s32.totalorder %s21, 0
    %s23 = scalar_select %p22, %s21, 0
    %p24 = scmp.lt.s32.totalorder %s23, 0
    %s25 = scalar_select %p24, %s23, 0
    %s26 = smul.addr %s25, 4
    %s27 = scalar_lea.vmem %s1, %s26
    %s28 = sadd.s32 0, 0
    %p29 = scmp.lt.s32.totalorder %s28, 0
    %s30 = scalar_select %p29, %s28, 0
  $region9: #{mse_loss.1} parent=0 // pred_fallthru
    _
  %s31 = sadd.s32 0, 0
  %p32 = scmp.lt.s32.totalorder %s31, 0
  %s33 = scalar_select %p32, %s31, 0
  %p34 = scmp.lt.s32.totalorder %s33, 0
  %s35 = scalar_select %p34, %s33, 0
  %s36 = smul.addr %s35, 4
  %s37 = scalar_lea.vmem %s0, %s36
  %s38 = sadd.s32 0, 0
  %p39 = scmp.lt.s32.totalorder %s38, 0
  %s40 = scalar_select %p39, %s38, 0
  %p41 = scmp.lt.s32.totalorder %s40, 0
  %s42 = scalar_select %p41, %s40, 0
  %s43 = smul.addr %s42, 4
  %s44 = scalar_lea.vmem %s1, %s43
  %s45 = sadd.s32 0, 0
  %p46 = scmp.lt.s32.totalorder %s45, 0
  %s47 = scalar_select %p46, %s45, 0
  %p48 = scmp.lt.s32.totalorder %s47, 0
  %s49 = scalar_select %p48, %s47, 0
  %s50 = smul.addr %s49, 4
  %s51 = scalar_lea.vmem %s0, %s50
  %s52 = sadd.s32 0, 0
  %p53 = scmp.lt.s32.totalorder %s52, 0
  %s54 = scalar_select %p53, %s52, 0
  %s55 = sadd.s32 0, 0
  %p56 = scmp.lt.s32.totalorder %s55, 0
  %s57 = scalar_select %p56, %s55, 0
  %p58 = scmp.lt.s32.totalorder %s57, 0
  %s59 = scalar_select %p58, %s57, 0
  %s60 = smul.addr %s59, 4
  %s61 = scalar_lea.vmem %s1, %s60
  %s62 = sadd.s32 0, 0
  %p63 = scmp.lt.s32.totalorder %s62, 0
  %s64 = scalar_select %p63, %s62, 0
  %p65 = scmp.eq.s32.totalorder 0, 0
  // Predicated region
  $region10: #{mse_loss.1} parent=0 // pred_check
    %p66 = pneg %p65
  $region11: #{mse_loss.1} parent=0 // pred_check_branch
    %68 = sbr.rel (%p66) target = $region13
  $region12: #{mse_loss.1} parent=0 // pred_region
    %69 = vst [vmem:[#allocation2] sm:$0x3] 0.0
  $region13: #{mse_loss.1} parent=0 // pred_fallthru
    _
  %v70 = vld [vmem:[%s51] sm:$0x7]
  %v71 = vld [vmem:[%s51 + $0x4] sm:$0x7]
  %v72 = vld [vmem:[%s61] sm:$0x7]
  %v73 = vld [vmem:[%s61 + $0x4] sm:$0x7]
  %v74 = vsub.f32 %v70, %v72
  %v75 = vsub.f32 %v71, %v73
  %v76 = vmul.f32 %v74, %v74
  %v77 = vmul.f32 %v75, %v75
  %v78 = vld [vmem:[#allocation2] sm:$0x3]
  %vm79 = vcmask 1042432
  %v80 = vsel %vm79, %v76, 0.0
  %v81 = vrot.slane %v80, 4
  %v82 = vadd.f32 %v80, %v81
  %v83 = vrot.slane %v82, 2
  %v84 = vadd.f32 %v82, %v83
  %v85 = vrot.slane %v84, 1
  %v86 = vadd.f32 %v84, %v85
  %v87 = vsel %vm79, %v77, 0.0
  %v88 = vrot.slane %v87, 4
  %v89 = vadd.f32 %v87, %v88
  %v90 = vrot.slane %v89, 2
  %v91 = vadd.f32 %v89, %v90
  %v92 = vrot.slane %v91, 1
  %v93 = vadd.f32 %v91, %v92
  %vm96 = vcmask 1041409
  %v97 = vsel %vm96, %v93, %v86
  %v99 = vadd.f32 %v78, %v97
  %100 = vst [vmem:[#allocation2] sm:$0x3] %v99
  // Predicated region
  $region14: #{mse_loss.1} parent=0 // pred_check
    %p101 = pneg %p65
  $region15: #{mse_loss.1} parent=0 // pred_check_branch
    %103 = sbr.rel (%p101) target = $region17
  $region16: #{mse_loss.1} parent=0 // pred_region
    %v104 = vld [vmem:[#allocation2] sm:$0x3]
    %vm105 = vcmask 1041408
    %v106 = vsel %vm105, %v104, 0.0
    %107 = vadd.xlane.f32.xlu0 %v106
    %v108 = vpop.xlane.xlu0 %107
    %vm109 = vcmask 1024
    %110 = vst.msk [vmem:[%s2] sm:$0x3] %vm109, %v108
  $region17: #{mse_loss.1} parent=0 // pred_fallthru
    _
  // Predicated region
  $region18: #{mse_loss.1} parent=0 // pred_check
    _
  $region19: #{mse_loss.1} parent=0 // pred_check_branch
    %112 = sbr.rel (0) target = $region21
  $region20: #{mse_loss.1} parent=0 // pred_region
    _
  $region21: #{mse_loss.1} parent=0 // pred_fallthru
    _
  // Predicated region
  $region22: #{mse_loss.1} parent=0 // pred_check
    _
  $region23: #{mse_loss.1} parent=0 // pred_check_branch
    %114 = sbr.rel (0) target = $region25
  $region24: #{mse_loss.1} parent=0 // pred_region
    _
  $region25: #{mse_loss.1} parent=0 // pred_fallthru
    _

</llo_original>
